<compile_context>
chip_gen: v7x
topology: tpu7x:2x2x1
jax: 0.10.0
libtpu: 0.0.40
codegen_flags: <defaults>
</compile_context>

<pallas_src>
import math
import numpy as np

import jax
import jax.numpy as jnp
from jax.experimental import pallas as pl
from jax.experimental.pallas import tpu as pltpu


# --------------------------------------------------------------------------------------
# Skeleton topology helpers (pure Python, setup-time only — same logic as skeleton.py)
# --------------------------------------------------------------------------------------
def calc_edge_mat(edges):
    edge_num = len(edges)
    mat = [[100000] * edge_num for _ in range(edge_num)]
    for i in range(edge_num):
        mat[i][i] = 0
    for i, a in enumerate(edges):
        for j, b in enumerate(edges):
            if a[0] == b[0] or a[0] == b[1] or a[1] == b[0] or a[1] == b[1]:
                mat[i][j] = 1
    for k in range(edge_num):
        for i in range(edge_num):
            for j in range(edge_num):
                mat[i][j] = min(mat[i][j], mat[i][k] + mat[k][j])
    return mat


def find_neighbor(edges, d):
    mat = calc_edge_mat(edges)
    edge_num = len(mat)
    neighbor_list = []
    for i in range(edge_num):
        neighbor_list.append([j for j in range(edge_num) if mat[i][j] <= d])
    global_part_neighbor = neighbor_list[0].copy()
    for i in global_part_neighbor:
        neighbor_list[i].append(edge_num)
    global_part_neighbor.append(edge_num)
    neighbor_list.append(global_part_neighbor)
    return neighbor_list


def build_skeleton_pool(edges, channels_per_edge):
    """Mirrors SkeletonPool.__init__ (pooling_mode='mean')."""
    edge_num = len(edges) + 1
    seq_list, pooling_list, new_edges = [], [], []
    degree = [0] * 100
    for e in edges:
        degree[e[0]] += 1
        degree[e[1]] += 1

    def find_seq(j, seq):
        if degree[j] > 2 and j != 0:
            seq_list.append(seq)
            seq = []
        if degree[j] == 1:
            seq_list.append(seq)
            return
        for idx, e in enumerate(edges):
            if e[0] == j:
                find_seq(e[1], seq + [idx])

    find_seq(0, [])
    for seq in seq_list:
        if len(seq) % 2 == 1:
            pooling_list.append([seq[0]])
            new_edges.append(list(edges[seq[0]]))
            seq = seq[1:]
        for i in range(0, len(seq), 2):
            pooling_list.append([seq[i], seq[i + 1]])
            new_edges.append([edges[seq[i]][0], edges[seq[i + 1]][1]])
    pooling_list.append([edge_num - 1])  # global position

    weight = np.zeros((len(pooling_list) * channels_per_edge,
                       edge_num * channels_per_edge), np.float32)
    for i, pair in enumerate(pooling_list):
        for j in pair:
            for c in range(channels_per_edge):
                weight[i * channels_per_edge + c, j * channels_per_edge + c] = 1.0 / len(pair)
    return jnp.asarray(weight), new_edges


def build_skeleton_linear(key, neighbor_list, in_channels, out_channels):
    """Deterministic re-implementation of SkeletonLinear parameter init (mask + per-joint
    kaiming-uniform-like blocks). Returned weight is ALREADY masked."""
    n = len(neighbor_list)
    cin_pj = in_channels // n
    cout_pj = out_channels // n
    mask = np.zeros((out_channels, in_channels), np.float32)
    row_bound = np.zeros((out_channels,), np.float32)
    for i, nb in enumerate(neighbor_list):
        expanded = [k * cin_pj + c for k in nb for c in range(cin_pj)]
        mask[i * cout_pj:(i + 1) * cout_pj, expanded] = 1.0
        row_bound[i * cout_pj:(i + 1) * cout_pj] = 1.0 / math.sqrt(len(expanded))

    kw, kb = jax.random.split(key)
    w = jax.random.uniform(kw, (out_channels, in_channels), jnp.float32, -1.0, 1.0)
    w = w * jnp.asarray(row_bound)[:, None] * jnp.asarray(mask)   # masked at build time
    b_bound = 1.0 / math.sqrt(in_channels)
    b = jax.random.uniform(kb, (out_channels,), jnp.float32, -b_bound, b_bound)
    return w, b


# --------------------------------------------------------------------------------------
# Fused Pallas kernel: all encoder layers in a single call
# --------------------------------------------------------------------------------------
def _round_up(x, m):
    return (x + m - 1) // m * m


def _make_fused_encoder_kernel(num_layers):
    def kernel(x_ref, *refs):
        # refs = [w0, w1, ..., w_{L-1}, out0, out1, ..., out_{L-1}]  (all lane-dense padded)
        cur = x_ref[...]
        for li in range(num_layers):
            w_ref = refs[li]
            o_ref = refs[num_layers + li]
            # bias is folded into the "ones row" of w (see wrapper): one MXU push, no VPU add
            h = jnp.dot(cur, w_ref[...], preferred_element_type=jnp.float32)
            cur = jnp.maximum(h, 0.2 * h)          # LeakyReLU(0.2): 2 VALU ops
            o_ref[...] = cur
    return kernel


def _weight_block_spec(shape):
    """Constant-index weight block; single-buffered when pipeline_mode is available
    (double-buffering a block whose index_map never changes is pure VMEM waste)."""
    buffered = getattr(pl, "Buffered", None)
    if buffered is not None:
        try:
            return pl.BlockSpec(shape, lambda i: (0, 0), pipeline_mode=buffered(1))
        except TypeError:
            pass
    return pl.BlockSpec(shape, lambda i: (0, 0))


def _choose_tile_b(B_pad, cin_pad, out_pads, w_bytes,
                   cap=1024, vmem_budget_bytes=14 << 20):
    """Batch-tile selection.
      * cap raised to 1024 (tiles >= 512 reach ~85% of HBM roofline; per-step overhead ~0.35us)
      * >= 2 grid steps whenever B_pad >= 16 so the 'parallel' batch axis can shard across
        v7x's two TensorCores
      * shrink TB until weights + double-buffered activations fit a conservative 14 MiB
        budget (under even v5e's 16 MiB default scoped-VMEM limit; v7x default is 32 MiB).
        For bigger real skeletons, raise vmem_limit_bytes via pltpu.CompilerParams instead.
    """
    if B_pad <= 8:
        return B_pad
    tb = min(cap, _round_up((B_pad + 1) // 2, 8))
    act_width = cin_pad + sum(out_pads)
    while tb > 8 and (w_bytes + 2 * 4 * tb * act_width) > vmem_budget_bytes:
        tb = _round_up(tb // 2, 8)
    return tb


def static_encoder_forward(x, layers, *, return_padded=False):
    """x: (B, J, 3).  Returns [x, out_layer0, out_layer1, ...] like the PyTorch module
    (later entries already have the trailing size-1 dim squeezed).

    return_padded=True returns the raw padded (B_pad, out_pad) buffers instead of slicing
    (avoids one extra HBM read+write per output). NOTE: non-last padded outputs carry a 1.0
    at lane out_dim (the propagated bias column); do not assume zero padding."""
    num_layers = len(layers)
    B = x.shape[0]
    x2 = x.reshape(B, -1)
    cin0 = x2.shape[1]

    # --- lane-dense padded widths; +1 lane reserved for the bias "ones" column ---------
    cin_pad = _round_up(cin0 + 1, 128)
    out_pads = []
    for li, lyr in enumerate(layers):
        extra = 0 if li == num_layers - 1 else 1   # non-last layers carry the ones lane onward
        out_pads.append(_round_up(lyr["out_dim"] + extra, 128))

    # --- batch tiling -------------------------------------------------------------------
    B_pad = _round_up(B, 8)
    w_bytes, prev = 0, cin_pad
    for op in out_pads:
        w_bytes += 2 * prev * op * 4               # conservative (assume 2 buffers) weight VMEM
        prev = op
    TB = _choose_tile_b(B_pad, cin_pad, out_pads, w_bytes)
    B_pad = _round_up(B_pad, TB)
    grid = (B_pad // TB,)

    # --- padded input with the ones column feeding the folded bias row -------------------
    x_pad = jnp.zeros((B_pad, cin_pad), jnp.float32)
    x_pad = x_pad.at[:B, :cin0].set(x2).at[:B, cin0].set(1.0)

    args = [x_pad]
    in_specs = [pl.BlockSpec((TB, cin_pad), lambda i: (i, 0))]
    out_shapes, out_specs = [], []
    prev_pad = cin_pad
    for li, (lyr, out_pad) in enumerate(zip(layers, out_pads)):
        in_dim, out_dim = lyr["in_dim"], lyr["out_dim"]
        w_pad = jnp.zeros((prev_pad, out_pad), jnp.float32)
        w_pad = w_pad.at[:in_dim, :out_dim].set(lyr["wf_t"])
        w_pad = w_pad.at[in_dim, :out_dim].set(lyr["bf_row"][0])   # bias rides the ones column
        if li < num_layers - 1:
            w_pad = w_pad.at[in_dim, out_dim].set(1.0)             # propagate ones lane onward
        args.append(w_pad)
        in_specs.append(_weight_block_spec((prev_pad, out_pad)))
        out_shapes.append(jax.ShapeDtypeStruct((B_pad, out_pad), jnp.float32))
        out_specs.append(pl.BlockSpec((TB, out_pad), lambda i: (i, 0)))
        prev_pad = out_pad

    padded_outs = pl.pallas_call(
        _make_fused_encoder_kernel(num_layers),
        out_shape=tuple(out_shapes),
        grid_spec=pltpu.PrefetchScalarGridSpec(
            num_scalar_prefetch=0,
            grid=grid,
            in_specs=in_specs,
            out_specs=tuple(out_specs)),
        compiler_params=pltpu.CompilerParams(
            dimension_semantics=("parallel",)),    # batch tiles shard across v7x's 2 TCs
    )(*args)

    if return_padded:
        return [x] + list(padded_outs)

    outputs = [x]
    for o, lyr in zip(padded_outs, layers):
        outputs.append(o[:B, :lyr["out_dim"]])
    return outputs


# --------------------------------------------------------------------------------------
# StaticEncoder: parameter construction (mask applied + pool folded at build time)
# --------------------------------------------------------------------------------------
def build_static_encoder_params(key, num_layers, skeleton_dist, edges):
    layers = []
    channels = 3
    for i in range(num_layers):
        neighbor_list = find_neighbor(edges, skeleton_dist)
        n = len(neighbor_list)
        in_ch = channels * n
        out_ch = channels * 2 * n
        key, klin = jax.random.split(key)
        w, bias = build_skeleton_linear(klin, neighbor_list, in_ch, out_ch)
        w_t = w.T                                   # (in_ch, out_ch), already masked
        b_row = bias.reshape(1, -1)                 # (1, out_ch)

        pool_t = None
        wf_t, bf_row = w_t, b_row
        if i < num_layers - 1:
            pool_w, new_edges = build_skeleton_pool(edges, channels_per_edge=channels * 2)
            pool_t = pool_w.T                       # (out_ch, pooled)
            wf_t = w_t @ pool_t                     # fold mean-pool into the weights
            bf_row = b_row @ pool_t
            edges = new_edges

        layers.append(dict(
            # fused params used by the Pallas kernel
            wf_t=wf_t, bf_row=bf_row, in_dim=in_ch, out_dim=wf_t.shape[1],
            # unfused params kept only for the reference check
            w_t=w_t, b_row=b_row, pool_t=pool_t))
        channels *= 2
    return layers


def static_encoder_reference(x, layers):
    """Pure-JAX reference replicating the original (unfused) PyTorch math."""
    outputs = [x]
    cur = x.reshape(x.shape[0], -1)
    for lyr in layers:
        h = cur @ lyr["w_t"] + lyr["b_row"]
        if lyr["pool_t"] is not None:
            h = h @ lyr["pool_t"]
        cur = jnp.where(h >= 0, h, 0.2 * h)
        outputs.append(cur)
    return outputs


# --------------------------------------------------------------------------------------
if __name__ == "__main__":
    # small synthetic skeleton: one chain of 4 edges + two chains of 2 edges off the root
    edges = [(0, 1), (1, 2), (2, 3), (3, 4), (0, 5), (5, 6), (0, 7), (7, 8)]
    num_layers = 2
    skeleton_dist = 2

    key = jax.random.PRNGKey(0)
    key, kparam, kx = jax.random.split(key, 3)
    layers = build_static_encoder_params(kparam, num_layers, skeleton_dist, edges)

    num_feat_groups = len(edges) + 1              # 8 edges + global part = 9

    # case 1: tiny batch (degenerates to grid=(1,)) — module-spec shapes [(2,9,3),(2,30),(2,60)]
    x_small = jax.random.normal(kx, (2, num_feat_groups, 3), jnp.float32)
    outs = jax.block_until_ready(static_encoder_forward(x_small, layers))
    refs = static_encoder_reference(x_small, layers)
    for o, r in zip(outs, refs):
        assert o.shape == r.shape, (o.shape, r.shape)
        np.testing.assert_allclose(np.asarray(o), np.asarray(r), rtol=1e-3, atol=1e-4)

    # case 2: larger batch — exercises the multi-tile grid (>=2 steps, parallel axis)
    key, kx2 = jax.random.split(key)
    x_big = jax.random.normal(kx2, (64, num_feat_groups, 3), jnp.float32)
    outs2 = jax.block_until_ready(static_encoder_forward(x_big, layers))
    refs2 = static_encoder_reference(x_big, layers)
    for o, r in zip(outs2, refs2):
        assert o.shape == r.shape, (o.shape, r.shape)
        np.testing.assert_allclose(np.asarray(o), np.asarray(r), rtol=1e-3, atol=1e-4)

    print("KERNEL_OK")
</pallas_src>

<mosaic_0001>
module attributes {stable_mosaic.version = 11 : i64} {
  func.func @kernel(%arg0: i32, %arg1: memref<8x128xf32, #tpu.memory_space<vmem>>, %arg2: memref<128x128xf32, #tpu.memory_space<vmem>>, %arg3: memref<128x128xf32, #tpu.memory_space<vmem>>, %arg4: memref<8x128xf32, #tpu.memory_space<vmem>>, %arg5: memref<8x128xf32, #tpu.memory_space<vmem>>) attributes {dimension_semantics = [#tpu.dimension_semantics<parallel>], iteration_bounds = array<i64: 1>, scalar_prefetch = 0 : i64, scratch_operands = 0 : i64, tpu.core_type = #tpu.core_type<tc>, window_params = [{transform_indices = @transform_0, window_bounds = array<i64: 8, 128>}, {pipeline_mode = #tpu.pipeline_mode<synchronous>, transform_indices = @transform_1, window_bounds = array<i64: 128, 128>}, {pipeline_mode = #tpu.pipeline_mode<synchronous>, transform_indices = @transform_2, window_bounds = array<i64: 128, 128>}, {transform_indices = @transform_3, window_bounds = array<i64: 8, 128>}, {transform_indices = @transform_4, window_bounds = array<i64: 8, 128>}]} {
    %c0 = arith.constant 0 : index
    %c0_0 = arith.constant 0 : index
    %0 = vector.load %arg1[%c0, %c0_0] : memref<8x128xf32, #tpu.memory_space<vmem>>, vector<8x128xf32>
    %c0_1 = arith.constant 0 : index
    %c0_2 = arith.constant 0 : index
    %1 = vector.load %arg2[%c0_1, %c0_2] : memref<128x128xf32, #tpu.memory_space<vmem>>, vector<128x128xf32>
    %cst = arith.constant dense<0.000000e+00> : vector<8x128xf32>
    %2 = tpu.matmul %0, %1, %cst {dimension_numbers = #tpu.dot_dimension_numbers<[1], [0], [0], [1], [0, 0, 1, 1], [], []>} : vector<8x128xf32>, vector<128x128xf32>, vector<8x128xf32> -> vector<8x128xf32>
    %cst_3 = arith.constant 2.000000e-01 : f32
    %3 = vector.broadcast %cst_3 : f32 to vector<8x128xf32>
    %4 = arith.mulf %3, %2 : vector<8x128xf32>
    %5 = arith.maximumf %2, %4 : vector<8x128xf32>
    %c0_4 = arith.constant 0 : index
    %c0_5 = arith.constant 0 : index
    %6 = vector.load %arg4[%c0_4, %c0_5] : memref<8x128xf32, #tpu.memory_space<vmem>>, vector<8x128xf32>
    tpu.vector_store %arg4[%c0_4, %c0_5], %5 {strides = array<i32>} : memref<8x128xf32, #tpu.memory_space<vmem>>, vector<8x128xf32>,
    %c0_6 = arith.constant 0 : index
    %c0_7 = arith.constant 0 : index
    %7 = vector.load %arg3[%c0_6, %c0_7] : memref<128x128xf32, #tpu.memory_space<vmem>>, vector<128x128xf32>
    %cst_8 = arith.constant dense<0.000000e+00> : vector<8x128xf32>
    %8 = tpu.matmul %5, %7, %cst_8 {dimension_numbers = #tpu.dot_dimension_numbers<[1], [0], [0], [1], [0, 0, 1, 1], [], []>} : vector<8x128xf32>, vector<128x128xf32>, vector<8x128xf32> -> vector<8x128xf32>
    %cst_9 = arith.constant 2.000000e-01 : f32
    %9 = vector.broadcast %cst_9 : f32 to vector<8x128xf32>
    %10 = arith.mulf %9, %8 : vector<8x128xf32>
    %11 = arith.maximumf %8, %10 : vector<8x128xf32>
    %c0_10 = arith.constant 0 : index
    %c0_11 = arith.constant 0 : index
    %12 = vector.load %arg5[%c0_10, %c0_11] : memref<8x128xf32, #tpu.memory_space<vmem>>, vector<8x128xf32>
    tpu.vector_store %arg5[%c0_10, %c0_11], %11 {strides = array<i32>} : memref<8x128xf32, #tpu.memory_space<vmem>>, vector<8x128xf32>,
    return
  }
  func.func @transform_0(%arg0: i32) -> (i32, i32) {
    %c0_i32 = arith.constant 0 : i32
    %c0_i32_0 = arith.constant 0 : i32
    return %arg0, %c0_i32 : i32, i32
  }
  func.func @transform_1(%arg0: i32) -> (i32, i32) {
    %c0_i32 = arith.constant 0 : i32
    %c0_i32_0 = arith.constant 0 : i32
    %c0_i32_1 = arith.constant 0 : i32
    return %c0_i32, %c0_i32_0 : i32, i32
  }
  func.func @transform_2(%arg0: i32) -> (i32, i32) {
    %c0_i32 = arith.constant 0 : i32
    %c0_i32_0 = arith.constant 0 : i32
    %c0_i32_1 = arith.constant 0 : i32
    return %c0_i32, %c0_i32_0 : i32, i32
  }
  func.func @transform_3(%arg0: i32) -> (i32, i32) {
    %c0_i32 = arith.constant 0 : i32
    %c0_i32_0 = arith.constant 0 : i32
    return %arg0, %c0_i32 : i32, i32
  }
  func.func @transform_4(%arg0: i32) -> (i32, i32) {
    %c0_i32 = arith.constant 0 : i32
    %c0_i32_0 = arith.constant 0 : i32
    return %arg0, %c0_i32 : i32, i32
  }
}

</mosaic_0001>

<llo_original>
// kernel: tpu_custom_call.1
$region0: #{tpu_custom_call.1}
  #allocation0 [shape = 'u32[]', space=smem, size = 0x4, offset = 0x4, fixed_abs, tag = 'smem constant byte address 0x4 - core index']
  #allocation1 [shape = 'u32[144,128]{1,0:T(1,128)}', space=vmem, size = 0x12000, scoped, tag = 'internal scratch']
  %s0 = inlined_call_operand.hbm [shape: f32[8,128], index: 0, kind: input, shape index: {}]
  %s1 = inlined_call_operand.hbm [shape: f32[128,128], index: 1, kind: input, shape index: {}]
  %s2 = inlined_call_operand.hbm [shape: f32[128,128], index: 2, kind: input, shape index: {}]
  %s3 = inlined_call_operand.hbm [shape: f32[8,128], index: 3, kind: output, shape index: {0}]
  %s4 = inlined_call_operand.hbm [shape: f32[8,128], index: 4, kind: output, shape index: {1}]
  %5 = xla_tuple %s3, %s4
  %s6 = sld [smem:[#allocation0]]
  $region42: #{tpu_custom_call.1} parent=0
    _
  %s8 = ssub.s32 1, %s6
  %s9 = scalar_select 0, %s8, %s6
  $region1: #{tpu_custom_call.1} parent=0
    #allocation2 [shape = 'u8[4096]{0}', space=vmem, size = 0x1000, scoped, tag = 'input window, operand 0, single buffered']
    #allocation3 [shape = 's32[1]{0}', space=sflag, size = 0x4, scoped, tag = 'scoped memory for tpu_custom_call.1']
    #allocation4 [shape = 's32[1]{0}', space=sflag, size = 0x4, scoped, tag = 'scoped memory for tpu_custom_call.1']
    #allocation5 [shape = 'u8[65536]{0}', space=vmem, size = 0x10000, scoped, tag = 'input window, operand 1, single buffered']
    #allocation6 [shape = 's32[1]{0}', space=sflag, size = 0x4, scoped, tag = 'scoped memory for tpu_custom_call.1']
    #allocation7 [shape = 'u8[65536]{0}', space=vmem, size = 0x10000, scoped, tag = 'input window, operand 2, single buffered']
    #allocation8 [shape = 'u8[4096]{0}', space=vmem, size = 0x1000, scoped, tag = 'output window, operand 0, single buffered']
    #allocation9 [shape = 'u8[4096]{0}', space=vmem, size = 0x1000, scoped, tag = 'output window, operand 1, single buffered']
    #allocation10 [shape = 's32[1]{0}', space=sflag, size = 0x4, scoped, tag = 'scoped memory for tpu_custom_call.1']
    %10 = vsyncpa [#allocation3], 0
    %11 = vsyncpa [#allocation6], 0
    %12 = vsyncpa [#allocation4], 0
    %13 = vsyncpa [#allocation10], 0
    // Predicated region
    $region2: #{tpu_custom_call.1} parent=1 // pred_check
      _
    $region3: #{tpu_custom_call.1} parent=1 // pred_check_branch
      %15 = sbr.rel (0) target = $region5
    $region4: #{tpu_custom_call.1} parent=1 // pred_region
      %s17 = ssub.s32 128, 128
      %18 = vsyncadd [#allocation3], %s17
      %s20 = sshll.u32 [#allocation2], 4
      %s21 = int_to_ptr.vmem [resolvable:$true] %s20
      %23 = dma.hbm_to_vmem [thread:$0]  %s0, 128, %s21, [#allocation3]
    $region5: #{tpu_custom_call.1} parent=1 // pred_fallthru
      _
    // Predicated region
    $region6: #{tpu_custom_call.1} parent=1 // pred_check
      _
    $region7: #{tpu_custom_call.1} parent=1 // pred_check_branch
      %25 = sbr.rel (0) target = $region9
    $region8: #{tpu_custom_call.1} parent=1 // pred_region
      %s27 = ssub.s32 2048, 2048
      %28 = vsyncadd [#allocation6], %s27
      %s29 = sshll.u32 [#allocation5], 4
      %s30 = int_to_ptr.vmem [resolvable:$true] %s29
      %35 = dma.hbm_to_vmem [thread:$0]  %s1, 2048, %s30, [#allocation6], 128, 128, 8
    $region9: #{tpu_custom_call.1} parent=1 // pred_fallthru
      _
    // Predicated region
    $region10: #{tpu_custom_call.1} parent=1 // pred_check
      _
    $region11: #{tpu_custom_call.1} parent=1 // pred_check_branch
      %37 = sbr.rel (0) target = $region13
    $region12: #{tpu_custom_call.1} parent=1 // pred_region
      %s39 = ssub.s32 2048, 2048
      %40 = vsyncadd [#allocation6], %s39
      %s41 = sshll.u32 [#allocation7], 4
      %s42 = int_to_ptr.vmem [resolvable:$true] %s41
      %47 = dma.hbm_to_vmem [thread:$0]  %s2, 2048, %s42, [#allocation6], 128, 128, 8
    $region13: #{tpu_custom_call.1} parent=1 // pred_fallthru
      _
    // Predicated region
    $region14: #{tpu_custom_call.1} parent=1 // pred_check
      _
    $region15: #{tpu_custom_call.1} parent=1 // pred_check_branch
      %49 = sbr.rel (0) target = $region17
    $region16: #{tpu_custom_call.1} parent=1 // pred_region
      %50 = dma.done [#allocation3], 128
    $region17: #{tpu_custom_call.1} parent=1 // pred_fallthru
      _
    // Predicated region
    $region18: #{tpu_custom_call.1} parent=1 // pred_check
      _
    $region19: #{tpu_custom_call.1} parent=1 // pred_check_branch
      %52 = sbr.rel (0) target = $region21
    $region20: #{tpu_custom_call.1} parent=1 // pred_region
      %53 = dma.done [#allocation6], 2048
    $region21: #{tpu_custom_call.1} parent=1 // pred_fallthru
      _
    // Predicated region
    $region22: #{tpu_custom_call.1} parent=1 // pred_check
      _
    $region23: #{tpu_custom_call.1} parent=1 // pred_check_branch
      %55 = sbr.rel (0) target = $region25
    $region24: #{tpu_custom_call.1} parent=1 // pred_region
      %56 = dma.done [#allocation6], 2048
    $region25: #{tpu_custom_call.1} parent=1 // pred_fallthru
      _
    %v57 = vld [vmem:[#allocation2] sm:$0xff]
    %v58 = vld [vmem:[#allocation5] sm:$0xff]
    %v59 = vld [vmem:[#allocation5 + $0x8] sm:$0xff]
    %v60 = vld [vmem:[#allocation5 + $0x10] sm:$0xff]
    %v61 = vld [vmem:[#allocation5 + $0x18] sm:$0xff]
    %v62 = vld [vmem:[#allocation5 + $0x20] sm:$0xff]
    %v63 = vld [vmem:[#allocation5 + $0x28] sm:$0xff]
    %v64 = vld [vmem:[#allocation5 + $0x30] sm:$0xff]
    %v65 = vld [vmem:[#allocation5 + $0x38] sm:$0xff]
    %v66 = vld [vmem:[#allocation5 + $0x40] sm:$0xff]
    %v67 = vld [vmem:[#allocation5 + $0x48] sm:$0xff]
    %v68 = vld [vmem:[#allocation5 + $0x50] sm:$0xff]
    %v69 = vld [vmem:[#allocation5 + $0x58] sm:$0xff]
    %v70 = vld [vmem:[#allocation5 + $0x60] sm:$0xff]
    %v71 = vld [vmem:[#allocation5 + $0x68] sm:$0xff]
    %v72 = vld [vmem:[#allocation5 + $0x70] sm:$0xff]
    %v73 = vld [vmem:[#allocation5 + $0x78] sm:$0xff]
    %74 = vmatprep.subr.mxu0 0.0
    %75 = vmatpush1.msra.mxu0 %v58
    %76 = vmatprep.subr.mxu0 0.0
    %77 = vmatpush1.msra.mxu0 %v59
    %78 = vmatprep.subr.mxu0 0.0
    %79 = vmatpush1.msra.mxu0 %v60
    %80 = vmatprep.subr.mxu0 0.0
    %81 = vmatpush1.msra.mxu0 %v61
    %82 = vmatprep.subr.mxu0 0.0
    %83 = vmatpush1.msra.mxu0 %v62
    %84 = vmatprep.subr.mxu0 0.0
    %85 = vmatpush1.msra.mxu0 %v63
    %86 = vmatprep.subr.mxu0 0.0
    %87 = vmatpush1.msra.mxu0 %v64
    %88 = vmatprep.subr.mxu0 0.0
    %89 = vmatpush1.msra.mxu0 %v65
    %90 = vmatprep.subr.mxu0 0.0
    %91 = vmatpush1.msra.mxu0 %v66
    %92 = vmatprep.subr.mxu0 0.0
    %93 = vmatpush1.msra.mxu0 %v67
    %94 = vmatprep.subr.mxu0 0.0
    %95 = vmatpush1.msra.mxu0 %v68
    %96 = vmatprep.subr.mxu0 0.0
    %97 = vmatpush1.msra.mxu0 %v69
    %98 = vmatprep.subr.mxu0 0.0
    %99 = vmatpush1.msra.mxu0 %v70
    %100 = vmatprep.subr.mxu0 0.0
    %101 = vmatpush1.msra.mxu0 %v71
    %102 = vmatprep.subr.mxu0 0.0
    %103 = vmatpush1.msra.mxu0 %v72
    %104 = vmatprep.subr.mxu0 0.0
    %105 = vmatpush1.msra.mxu0 %v73
    %106 = vmatprep.subr.mxu0 0.0
    %107 = vmatpush1.msra.mxu0 0.0
    %108 = vmatprep.subr.mxu0 0.0
    %109 = vmatpush1.msra.mxu0 0.0
    %110 = vmatprep.subr.mxu0 0.0
    %111 = vmatpush1.msra.mxu0 0.0
    %112 = vmatprep.subr.mxu0 0.0
    %113 = vmatpush1.msra.mxu0 0.0
    %114 = vmatprep.subr.mxu0 0.0
    %115 = vmatpush1.msra.mxu0 0.0
    %116 = vmatprep.subr.mxu0 0.0
    %117 = vmatpush1.msra.mxu0 0.0
    %118 = vmatprep.subr.mxu0 0.0
    %119 = vmatpush1.msra.mxu0 0.0
    %120 = vmatprep.subr.mxu0 0.0
    %121 = vmatpush1.msra.mxu0 0.0
    %122 = vmatprep.subr.mxu0 0.0
    %123 = vmatpush1.msra.mxu0 0.0
    %124 = vmatprep.subr.mxu0 0.0
    %125 = vmatpush1.msra.mxu0 0.0
    %126 = vmatprep.subr.mxu0 0.0
    %127 = vmatpush1.msra.mxu0 0.0
    %128 = vmatprep.subr.mxu0 0.0
    %129 = vmatpush1.msra.mxu0 0.0
    %130 = vmatprep.subr.mxu0 0.0
    %131 = vmatpush1.msra.mxu0 0.0
    %132 = vmatprep.subr.mxu0 0.0
    %133 = vmatpush1.msra.mxu0 0.0
    %134 = vmatprep.subr.mxu0 0.0
    %135 = vmatpush1.msra.mxu0 0.0
    %136 = vmatprep.subr.mxu0 0.0
    %137 = vmatpush1.msra.mxu0 0.0
    %138 = vmatprep.mubr.f32.mxu0 0.0
    %139 = vmatmul.mubr.f32.gmra.mrb[0].mxu0 %v57
    %v140 = vpop.f32.mrb[0].mxu0
    %v141 = vadd.f32 0.0, %v140
    %v142 = vpop.f32.mrb[0].mxu0
    %143 = vdwg.mxu0
    %v144 = vmul.f32 %v141, 0.2
    %v145 = vmax.f32 %v141, %v144
    %146 = vst [vmem:[#allocation8] sm:$0xff] %v145
    %v147 = vld [vmem:[#allocation7] sm:$0xff]
    %v148 = vld [vmem:[#allocation7 + $0x8] sm:$0xff]
    %v149 = vld [vmem:[#allocation7 + $0x10] sm:$0xff]
    %v150 = vld [vmem:[#allocation7 + $0x18] sm:$0xff]
    %v151 = vld [vmem:[#allocation7 + $0x20] sm:$0xff]
    %v152 = vld [vmem:[#allocation7 + $0x28] sm:$0xff]
    %v153 = vld [vmem:[#allocation7 + $0x30] sm:$0xff]
    %v154 = vld [vmem:[#allocation7 + $0x38] sm:$0xff]
    %v155 = vld [vmem:[#allocation7 + $0x40] sm:$0xff]
    %v156 = vld [vmem:[#allocation7 + $0x48] sm:$0xff]
    %v157 = vld [vmem:[#allocation7 + $0x50] sm:$0xff]
    %v158 = vld [vmem:[#allocation7 + $0x58] sm:$0xff]
    %v159 = vld [vmem:[#allocation7 + $0x60] sm:$0xff]
    %v160 = vld [vmem:[#allocation7 + $0x68] sm:$0xff]
    %v161 = vld [vmem:[#allocation7 + $0x70] sm:$0xff]
    %v162 = vld [vmem:[#allocation7 + $0x78] sm:$0xff]
    %163 = vmatprep.subr.mxu0 0.0
    %164 = vmatpush1.msra.mxu0 %v147
    %165 = vmatprep.subr.mxu0 0.0
    %166 = vmatpush1.msra.mxu0 %v148
    %167 = vmatprep.subr.mxu0 0.0
    %168 = vmatpush1.msra.mxu0 %v149
    %169 = vmatprep.subr.mxu0 0.0
    %170 = vmatpush1.msra.mxu0 %v150
    %171 = vmatprep.subr.mxu0 0.0
    %172 = vmatpush1.msra.mxu0 %v151
    %173 = vmatprep.subr.mxu0 0.0
    %174 = vmatpush1.msra.mxu0 %v152
    %175 = vmatprep.subr.mxu0 0.0
    %176 = vmatpush1.msra.mxu0 %v153
    %177 = vmatprep.subr.mxu0 0.0
    %178 = vmatpush1.msra.mxu0 %v154
    %179 = vmatprep.subr.mxu0 0.0
    %180 = vmatpush1.msra.mxu0 %v155
    %181 = vmatprep.subr.mxu0 0.0
    %182 = vmatpush1.msra.mxu0 %v156
    %183 = vmatprep.subr.mxu0 0.0
    %184 = vmatpush1.msra.mxu0 %v157
    %185 = vmatprep.subr.mxu0 0.0
    %186 = vmatpush1.msra.mxu0 %v158
    %187 = vmatprep.subr.mxu0 0.0
    %188 = vmatpush1.msra.mxu0 %v159
    %189 = vmatprep.subr.mxu0 0.0
    %190 = vmatpush1.msra.mxu0 %v160
    %191 = vmatprep.subr.mxu0 0.0
    %192 = vmatpush1.msra.mxu0 %v161
    %193 = vmatprep.subr.mxu0 0.0
    %194 = vmatpush1.msra.mxu0 %v162
    %195 = vmatprep.subr.mxu0 0.0
    %196 = vmatpush1.msra.mxu0 0.0
    %197 = vmatprep.subr.mxu0 0.0
    %198 = vmatpush1.msra.mxu0 0.0
    %199 = vmatprep.subr.mxu0 0.0
    %200 = vmatpush1.msra.mxu0 0.0
    %201 = vmatprep.subr.mxu0 0.0
    %202 = vmatpush1.msra.mxu0 0.0
    %203 = vmatprep.subr.mxu0 0.0
    %204 = vmatpush1.msra.mxu0 0.0
    %205 = vmatprep.subr.mxu0 0.0
    %206 = vmatpush1.msra.mxu0 0.0
    %207 = vmatprep.subr.mxu0 0.0
    %208 = vmatpush1.msra.mxu0 0.0
    %209 = vmatprep.subr.mxu0 0.0
    %210 = vmatpush1.msra.mxu0 0.0
    %211 = vmatprep.subr.mxu0 0.0
    %212 = vmatpush1.msra.mxu0 0.0
    %213 = vmatprep.subr.mxu0 0.0
    %214 = vmatpush1.msra.mxu0 0.0
    %215 = vmatprep.subr.mxu0 0.0
    %216 = vmatpush1.msra.mxu0 0.0
    %217 = vmatprep.subr.mxu0 0.0
    %218 = vmatpush1.msra.mxu0 0.0
    %219 = vmatprep.subr.mxu0 0.0
    %220 = vmatpush1.msra.mxu0 0.0
    %221 = vmatprep.subr.mxu0 0.0
    %222 = vmatpush1.msra.mxu0 0.0
    %223 = vmatprep.subr.mxu0 0.0
    %224 = vmatpush1.msra.mxu0 0.0
    %225 = vmatprep.subr.mxu0 0.0
    %226 = vmatpush1.msra.mxu0 0.0
    %227 = vmatprep.mubr.f32.mxu0 0.0
    %228 = vmatmul.mubr.f32.gmra.mrb[0].mxu0 %v145
    %v229 = vpop.f32.mrb[0].mxu0
    %v230 = vadd.f32 0.0, %v229
    %v231 = vpop.f32.mrb[0].mxu0
    %232 = vdwg.mxu0
    %v233 = vmul.f32 %v230, 0.2
    %v234 = vmax.f32 %v230, %v233
    %235 = vst [vmem:[#allocation9] sm:$0xff] %v234
    // Predicated region
    $region26: #{tpu_custom_call.1} parent=1 // pred_check
      _
    $region27: #{tpu_custom_call.1} parent=1 // pred_check_branch
      %237 = sbr.rel (0) target = $region29
    $region28: #{tpu_custom_call.1} parent=1 // pred_region
      %s239 = ssub.s32 128, 128
      %240 = vsyncadd [#allocation4], %s239
      %s242 = sshll.u32 [#allocation8], 4
      %s243 = int_to_ptr.vmem [resolvable:$true] %s242
      %245 = dma.vmem_to_hbm [thread:$0]  %s243, 128, %s3, [#allocation4]
    $region29: #{tpu_custom_call.1} parent=1 // pred_fallthru
      _
    // Predicated region
    $region30: #{tpu_custom_call.1} parent=1 // pred_check
      _
    $region31: #{tpu_custom_call.1} parent=1 // pred_check_branch
      %247 = sbr.rel (0) target = $region33
    $region32: #{tpu_custom_call.1} parent=1 // pred_region
      %s249 = ssub.s32 128, 128
      %250 = vsyncadd [#allocation10], %s249
      %s252 = sshll.u32 [#allocation9], 4
      %s253 = int_to_ptr.vmem [resolvable:$true] %s252
      %255 = dma.vmem_to_hbm [thread:$0]  %s253, 128, %s4, [#allocation10]
    $region33: #{tpu_custom_call.1} parent=1 // pred_fallthru
      _
    // Predicated region
    $region34: #{tpu_custom_call.1} parent=1 // pred_check
      _
    $region35: #{tpu_custom_call.1} parent=1 // pred_check_branch
      %257 = sbr.rel (0) target = $region37
    $region36: #{tpu_custom_call.1} parent=1 // pred_region
      %258 = dma.done [#allocation4], 128
    $region37: #{tpu_custom_call.1} parent=1 // pred_fallthru
      _
    // Predicated region
    $region38: #{tpu_custom_call.1} parent=1 // pred_check
      _
    $region39: #{tpu_custom_call.1} parent=1 // pred_check_branch
      %260 = sbr.rel (0) target = $region41
    $region40: #{tpu_custom_call.1} parent=1 // pred_region
      %261 = dma.done [#allocation10], 128
    $region41: #{tpu_custom_call.1} parent=1 // pred_fallthru
      _
    %262 = vsyncpa [#allocation3], 1
    %263 = vsyncpa [#allocation6], 1
    %264 = vsyncpa [#allocation4], 1
    %265 = vsyncpa [#allocation10], 1

</llo_original>
